<compile_context>
chip_gen: v7x
topology: tpu7x:2x2x1
jax: 0.10.0
libtpu: 0.0.40
codegen_flags: <defaults>
</compile_context>

<pallas_src>
import jax
import jax.numpy as jnp
from jax.experimental import pallas as pl
from jax.experimental.pallas import tpu as pltpu


def _round_up(v, m):
    return ((v + m - 1) // m) * m


def _vmem_capacity_bytes():
    try:
        return int(pltpu.get_tpu_info().vmem_capacity_bytes)
    except Exception:
        return 64 << 20  # conservative fallback (v7x-sized VMEM)


def _vmem_limit(stream_block_bytes, resident_bytes, vmem_cap):
    # 2 buffers per pipelined (streamed) block + resident operands + headroom,
    # clamped to 90% of this generation's physical VMEM.
    need = sum(2 * int(v) for v in stream_block_bytes) + int(resident_bytes)
    need += 8 << 20
    return int(min(max(need, 32 << 20), int(vmem_cap * 0.9)))


def _pick_tiles(n, vmem_cap):
    """Pick (n_pad, tm, tk) with tm | n_pad and tk | n_pad (all multiples of 128)."""
    n_pad128 = _round_up(n, 128)
    if n_pad128 <= 1024:
        # Small graph: whole contraction dim in one tile.
        tm = min(512, n_pad128)
        n_pad = _round_up(n_pad128, tm)
        return n_pad, tm, n_pad
    tm = 512                      # never let the row tile collapse below 512
    n_pad = _round_up(n, 512)
    # Bigger contraction tiles on 128 MiB parts (v5e/v6e), smaller on 64 MiB v7x.
    tk_target = 4096 if vmem_cap >= (96 << 20) else 2048
    tk = 512
    for cand in (4096, 2048, 1024, 512):
        if cand <= tk_target and n_pad % cand == 0:
            tk = cand
            break
    return n_pad, tm, tk


# ----------------------------------------------------------------------------
# Pass 1: conv1 with K-tiling; W2 folded into the finalize.
#   out[i] = (relu(A[i,:] @ XW1 + b1)) @ W2        (bf16 storage, f32 math)
# ----------------------------------------------------------------------------
def conv1_kernel(a_ref, xw1_ref, b1_ref, w2_ref, h1w2_ref, acc_ref):
    k = pl.program_id(1)

    @pl.when(k == 0)
    def _init():
        acc_ref[...] = jnp.zeros_like(acc_ref)

    acc_ref[...] += jnp.dot(a_ref[...], xw1_ref[...],
                            preferred_element_type=jnp.float32)

    @pl.when(k == pl.num_programs(1) - 1)
    def _finalize():
        h1 = jnp.maximum(acc_ref[...] + b1_ref[...], 0.0)   # bias + relu in f32
        # Padded rows (>= n) become relu(b1) @ W2; never consumed because
        # A_hat's / P's padded columns are zero.
        h1w2_ref[...] = jnp.dot(h1.astype(jnp.bfloat16), w2_ref[...],
                                preferred_element_type=jnp.float32
                                ).astype(jnp.bfloat16)


# ----------------------------------------------------------------------------
# Pass 2: conv2 with K-tiling + per-row-tile pooled partial (sum-pool matrix).
#   partial[i] = P01[:, tile_i] @ (A[i,:] @ H1W2 + b2)
# ----------------------------------------------------------------------------
def conv2_pool_kernel(a_ref, h1w2_ref, b2_ref, p_ref, part_ref, acc_ref):
    k = pl.program_id(1)

    @pl.when(k == 0)
    def _init():
        acc_ref[...] = jnp.zeros_like(acc_ref)

    acc_ref[...] += jnp.dot(a_ref[...], h1w2_ref[...],
                            preferred_element_type=jnp.float32)

    @pl.when(k == pl.num_programs(1) - 1)
    def _finalize():
        h2 = (acc_ref[...] + b2_ref[...]).astype(jnp.bfloat16)
        part_ref[...] = jnp.dot(p_ref[...], h2,
                                preferred_element_type=jnp.float32)[None]


# ----------------------------------------------------------------------------
# Wrapper: padding, casting, two pallas_call passes, tiny XLA epilogue.
# ----------------------------------------------------------------------------
def gcn_net_pallas(a_hat, x, w1, b1, w2, b2, pool_onehot, counts, w_lin, b_lin):
    n = x.shape[0]
    h = w1.shape[1]
    b = pool_onehot.shape[0]

    h_pad = _round_up(h, 128)   # keep at 128: kernel is HBM-bound, not MXU-bound
    b_pad = _round_up(b, 8)

    vmem_cap = _vmem_capacity_bytes()
    n_pad, tm, tk = _pick_tiles(n, vmem_cap)
    grid = (n_pad // tm, n_pad // tk)

    # Precompute XW1 = X @ W1 (tiny XLA matmul); each streamed kernel step is
    # then a single A_tile @ (tk x h_pad) MXU contraction.
    xw1 = jnp.dot(x, w1, preferred_element_type=jnp.float32)

    # TODO(synk): store A_hat as fp8 (v7x) / int8+per-row-scale (v5e/v6e) to
    # halve the dominant O(N^2) HBM stream; bf16 kept here for fidelity.
    a_p = jnp.zeros((n_pad, n_pad), jnp.bfloat16).at[:n, :n].set(
        a_hat.astype(jnp.bfloat16))
    xw1_p = jnp.zeros((n_pad, h_pad), jnp.bfloat16).at[:n, :h].set(
        xw1.astype(jnp.bfloat16))
    b1_p = jnp.zeros((1, h_pad), jnp.float32).at[:, :h].set(jnp.reshape(b1, (1, -1)))
    w2_p = jnp.zeros((h_pad, h_pad), jnp.bfloat16).at[:h, :h].set(
        w2.astype(jnp.bfloat16))
    b2_p = jnp.zeros((1, h_pad), jnp.float32).at[:, :h].set(jnp.reshape(b2, (1, -1)))
    # 0/1 "sum" pooling matrix (exact in bf16); mean normalization happens in f32.
    p_p = jnp.zeros((b_pad, n_pad), jnp.bfloat16).at[:b, :n].set(
        pool_onehot.astype(jnp.bfloat16))

    # -------------------- pass 1: conv1 (+ folded W2) --------------------
    p1_stream = [tm * tk * 2, tk * h_pad * 2, tm * h_pad * 2]
    p1_resident = h_pad * h_pad * 2 + 8 * h_pad * 4 + tm * h_pad * 4
    h1w2 = pl.pallas_call(
        conv1_kernel,
        out_shape=jax.ShapeDtypeStruct((n_pad, h_pad), jnp.bfloat16),
        grid=grid,
        in_specs=[
            pl.BlockSpec((tm, tk), lambda i, k: (i, k)),        # A_hat tile (streamed)
            pl.BlockSpec((tk, h_pad), lambda i, k: (k, 0)),     # XW1 k-slice (streamed)
            pl.BlockSpec((1, h_pad), lambda i, k: (0, 0)),      # b1 (resident)
            pl.BlockSpec((h_pad, h_pad), lambda i, k: (0, 0)),  # W2 (resident)
        ],
        out_specs=pl.BlockSpec((tm, h_pad), lambda i, k: (i, 0)),
        scratch_shapes=[pltpu.VMEM((tm, h_pad), jnp.float32)],
        compiler_params=pltpu.CompilerParams(
            dimension_semantics=("parallel", "arbitrary"),
            vmem_limit_bytes=_vmem_limit(p1_stream, p1_resident, vmem_cap)),
        cost_estimate=pl.CostEstimate(
            flops=2 * n_pad * n_pad * h_pad + 2 * n_pad * h_pad * h_pad,
            transcendentals=0,
            bytes_accessed=(n_pad * n_pad * 2 + 2 * n_pad * h_pad * 2
                            + h_pad * h_pad * 2)),
    )(a_p, xw1_p, b1_p, w2_p)

    # ------------- pass 2: conv2 + per-row-tile pooled partials -------------
    p2_stream = [tm * tk * 2, tk * h_pad * 2, b_pad * tm * 2, b_pad * h_pad * 4]
    p2_resident = 8 * h_pad * 4 + tm * h_pad * 4
    partials = pl.pallas_call(
        conv2_pool_kernel,
        out_shape=jax.ShapeDtypeStruct((grid[0], b_pad, h_pad), jnp.float32),
        grid=grid,
        in_specs=[
            pl.BlockSpec((tm, tk), lambda i, k: (i, k)),        # A_hat tile
            pl.BlockSpec((tk, h_pad), lambda i, k: (k, 0)),     # H1W2 k-slice
            pl.BlockSpec((1, h_pad), lambda i, k: (0, 0)),      # b2
            pl.BlockSpec((b_pad, tm), lambda i, k: (0, i)),     # pool column tile
        ],
        out_specs=pl.BlockSpec((1, b_pad, h_pad), lambda i, k: (i, 0, 0)),
        scratch_shapes=[pltpu.VMEM((tm, h_pad), jnp.float32)],
        compiler_params=pltpu.CompilerParams(
            dimension_semantics=("parallel", "arbitrary"),
            vmem_limit_bytes=_vmem_limit(p2_stream, p2_resident, vmem_cap)),
        cost_estimate=pl.CostEstimate(
            flops=2 * n_pad * n_pad * h_pad + 2 * b_pad * n_pad * h_pad,
            transcendentals=0,
            bytes_accessed=(n_pad * n_pad * 2 + n_pad * h_pad * 2
                            + b_pad * n_pad * 2 + grid[0] * b_pad * h_pad * 4)),
    )(a_p, h1w2, b2_p, p_p)

    # Tiny XLA epilogue: sum row-tile partials, mean-normalize, final Linear.
    pooled = jnp.sum(partials, axis=0)[:b, :h] / counts
    return jnp.dot(pooled, w_lin) + jnp.reshape(b_lin, (1, -1))


# ----------------------------------------------------------------------------
# Glue (plain JAX): normalized adjacency + pooling matrix / counts.
# ----------------------------------------------------------------------------
def build_normalized_adjacency(edge_index, edge_weight, num_nodes):
    # TODO(synk): dense O(N^2) A_hat built by scatter-add outside the kernel;
    # a sparse/paged formulation would be needed for very large graphs.
    src, dst = edge_index[0], edge_index[1]
    loop = jnp.arange(num_nodes, dtype=src.dtype)
    src = jnp.concatenate([src, loop])
    dst = jnp.concatenate([dst, loop])
    w = jnp.concatenate([edge_weight, jnp.ones((num_nodes,), jnp.float32)])

    deg = jnp.zeros((num_nodes,), jnp.float32).at[dst].add(w)
    dinv = jnp.where(deg > 0, 1.0 / jnp.sqrt(deg), 0.0)
    norm = dinv[src] * w * dinv[dst]

    a_hat = jnp.zeros((num_nodes, num_nodes), jnp.float32).at[dst, src].add(norm)
    return a_hat


def build_pool(batch, num_graphs):
    onehot = (batch[None, :] == jnp.arange(num_graphs)[:, None]).astype(jnp.float32)
    counts = jnp.maximum(onehot.sum(axis=1, keepdims=True), 1.0)
    return onehot, counts  # [B, N] 0/1 matrix, [B, 1] counts


def gcn_net_forward(x, edge_index, edge_weight, batch, params):
    n = x.shape[0]
    num_graphs = int(params["num_graphs"])
    a_hat = build_normalized_adjacency(edge_index, edge_weight, n)
    pool_onehot, counts = build_pool(batch, num_graphs)
    return gcn_net_pallas(
        a_hat, x,
        params["w1"], params["b1"],
        params["w2"], params["b2"],
        pool_onehot, counts,
        params["w_lin"], params["b_lin"],
    )


def gcn_net_reference(x, edge_index, edge_weight, batch, params):
    # Pure-JAX f32 reference of the same forward pass (for validation).
    n = x.shape[0]
    num_graphs = int(params["num_graphs"])
    a_hat = build_normalized_adjacency(edge_index, edge_weight, n)
    pool_onehot, counts = build_pool(batch, num_graphs)
    h1 = jnp.maximum(a_hat @ (x @ params["w1"]) + params["b1"], 0.0)
    h2 = a_hat @ (h1 @ params["w2"]) + params["b2"]
    pooled = (pool_onehot @ h2) / counts
    return pooled @ params["w_lin"] + params["b_lin"]


# ----------------------------------------------------------------------------
# Deterministic parameter init (glorot-ish, synthetic).
# ----------------------------------------------------------------------------
def init_params(key, node_features_size, hidden_channels, num_graphs):
    k1, k2, k3 = jax.random.split(key, 3)

    def glorot(k, shape):
        scale = jnp.sqrt(6.0 / (shape[0] + shape[1]))
        return jax.random.uniform(k, shape, jnp.float32, -scale, scale)

    return {
        "w1": glorot(k1, (node_features_size, hidden_channels)),
        "b1": jnp.zeros((1, hidden_channels), jnp.float32),
        "w2": glorot(k2, (hidden_channels, hidden_channels)),
        "b2": jnp.zeros((1, hidden_channels), jnp.float32),
        "w_lin": glorot(k3, (hidden_channels, 1)),
        "b_lin": jnp.zeros((1, 1), jnp.float32),
        "num_graphs": num_graphs,
    }


def _run_case(key, n_nodes, n_edges, n_graphs, node_features=10, hidden=32):
    kx, ke, kw, kp = jax.random.split(key, 4)
    x = jax.random.normal(kx, (n_nodes, node_features), jnp.float32)
    src = jax.random.randint(ke, (n_edges,), 0, n_nodes, jnp.int32)
    dst = jax.random.randint(jax.random.fold_in(ke, 1), (n_edges,), 0,
                             n_nodes, jnp.int32)
    edge_index = jnp.stack([src, dst], axis=0)
    edge_weight = jax.random.uniform(kw, (n_edges,), jnp.float32, 0.1, 1.0)
    per = max(n_nodes // n_graphs, 1)
    batch = jnp.minimum(jnp.arange(n_nodes, dtype=jnp.int32) // per, n_graphs - 1)
    params = init_params(kp, node_features, hidden, n_graphs)

    out = gcn_net_forward(x, edge_index, edge_weight, batch, params)
    out = jax.block_until_ready(out)
    assert out.shape == (n_graphs, 1)

    ref = gcn_net_reference(x, edge_index, edge_weight, batch, params)
    err = float(jnp.max(jnp.abs(out - ref)))
    tol = 5e-2 * (1.0 + float(jnp.max(jnp.abs(ref))))   # bf16-appropriate slack
    assert err <= tol, f"kernel/reference mismatch: {err} > {tol}"
    return out


if __name__ == "__main__":
    key = jax.random.PRNGKey(0)
    k_small, k_med = jax.random.split(key)

    # Small case: 2 graphs x 8 nodes (single-tile grid).
    _run_case(k_small, n_nodes=16, n_edges=48, n_graphs=2)

    # Medium case: exercises the K-tiled multi-tile grid
    # (n_pad=1536 -> grid (3, 3) with tm=tk=512) and the partial-pool epilogue.
    _run_case(k_med, n_nodes=1100, n_edges=4096, n_graphs=3)

    print("KERNEL_OK")
</pallas_src>

<mosaic_0001>
module attributes {stable_mosaic.version = 11 : i64} {
  func.func @conv1_kernel(%arg0: i32, %arg1: i32, %arg2: memref<128x128xbf16, #tpu.memory_space<vmem>>, %arg3: memref<128x128xbf16, #tpu.memory_space<vmem>>, %arg4: memref<1x128xf32, #tpu.memory_space<vmem>>, %arg5: memref<128x128xbf16, #tpu.memory_space<vmem>>, %arg6: memref<128x128xbf16, #tpu.memory_space<vmem>>, %arg7: memref<128x128xf32, #tpu.memory_space<vmem>>) attributes {dimension_semantics = [#tpu.dimension_semantics<parallel>, #tpu.dimension_semantics<arbitrary>], iteration_bounds = array<i64: 1, 1>, scalar_prefetch = 0 : i64, scratch_operands = 1 : i64, tpu.core_type = #tpu.core_type<tc>, window_params = [{transform_indices = @transform_0, window_bounds = array<i64: 128, 128>}, {transform_indices = @transform_1, window_bounds = array<i64: 128, 128>}, {pipeline_mode = #tpu.pipeline_mode<synchronous>, transform_indices = @transform_2, window_bounds = array<i64: 1, 128>}, {pipeline_mode = #tpu.pipeline_mode<synchronous>, transform_indices = @transform_3, window_bounds = array<i64: 128, 128>}, {transform_indices = @transform_4, window_bounds = array<i64: 128, 128>}]} {
    %c0_i32 = arith.constant 0 : i32
    %0 = arith.cmpi eq, %arg1, %c0_i32 : i32
    %1 = arith.extui %0 : i1 to i32
    %c0_i32_0 = arith.constant 0 : i32
    %2 = arith.cmpi ne, %1, %c0_i32_0 : i32
    scf.if %2 {
      %cst_10 = arith.constant 0.000000e+00 : f32
      %12 = vector.broadcast %cst_10 : f32 to vector<128x128xf32>
      %c0_11 = arith.constant 0 : index
      %c0_12 = arith.constant 0 : index
      %13 = vector.load %arg7[%c0_11, %c0_12] : memref<128x128xf32, #tpu.memory_space<vmem>>, vector<128x128xf32>
      tpu.vector_store %arg7[%c0_11, %c0_12], %12 {strides = array<i32>} : memref<128x128xf32, #tpu.memory_space<vmem>>, vector<128x128xf32>,
    } else {
    }
    %c0 = arith.constant 0 : index
    %c0_1 = arith.constant 0 : index
    %3 = vector.load %arg7[%c0, %c0_1] : memref<128x128xf32, #tpu.memory_space<vmem>>, vector<128x128xf32>
    %c0_2 = arith.constant 0 : index
    %c0_3 = arith.constant 0 : index
    %4 = vector.load %arg2[%c0_2, %c0_3] : memref<128x128xbf16, #tpu.memory_space<vmem>>, vector<128x128xbf16>
    %c0_4 = arith.constant 0 : index
    %c0_5 = arith.constant 0 : index
    %5 = vector.load %arg3[%c0_4, %c0_5] : memref<128x128xbf16, #tpu.memory_space<vmem>>, vector<128x128xbf16>
    %cst = arith.constant dense<0.000000e+00> : vector<128x128xf32>
    %6 = tpu.matmul %4, %5, %cst {dimension_numbers = #tpu.dot_dimension_numbers<[1], [0], [0], [1], [0, 0, 1, 1], [], []>} : vector<128x128xbf16>, vector<128x128xbf16>, vector<128x128xf32> -> vector<128x128xf32>
    %7 = arith.addf %3, %6 : vector<128x128xf32>
    %c0_6 = arith.constant 0 : index
    %c0_7 = arith.constant 0 : index
    %8 = vector.load %arg7[%c0_6, %c0_7] : memref<128x128xf32, #tpu.memory_space<vmem>>, vector<128x128xf32>
    tpu.vector_store %arg7[%c0_6, %c0_7], %7 {strides = array<i32>} : memref<128x128xf32, #tpu.memory_space<vmem>>, vector<128x128xf32>,
    %c0_i32_8 = arith.constant 0 : i32
    %9 = arith.cmpi eq, %arg1, %c0_i32_8 : i32
    %10 = arith.extui %9 : i1 to i32
    %c0_i32_9 = arith.constant 0 : i32
    %11 = arith.cmpi ne, %10, %c0_i32_9 : i32
    scf.if %11 {
      %c0_10 = arith.constant 0 : index
      %c0_11 = arith.constant 0 : index
      %12 = vector.load %arg7[%c0_10, %c0_11] : memref<128x128xf32, #tpu.memory_space<vmem>>, vector<128x128xf32>
      %c0_12 = arith.constant 0 : index
      %c0_13 = arith.constant 0 : index
      %13 = vector.load %arg4[%c0_12, %c0_13] : memref<1x128xf32, #tpu.memory_space<vmem>>, vector<1x128xf32>
      %14 = vector.broadcast %13 : vector<1x128xf32> to vector<128x128xf32>
      %15 = arith.addf %12, %14 : vector<128x128xf32>
      %cst_14 = arith.constant 0.000000e+00 : f32
      %16 = vector.broadcast %cst_14 : f32 to vector<128x128xf32>
      %17 = arith.maximumf %15, %16 : vector<128x128xf32>
      %18 = arith.truncf %17 : vector<128x128xf32> to vector<128x128xbf16>
      %c0_15 = arith.constant 0 : index
      %c0_16 = arith.constant 0 : index
      %19 = vector.load %arg5[%c0_15, %c0_16] : memref<128x128xbf16, #tpu.memory_space<vmem>>, vector<128x128xbf16>
      %cst_17 = arith.constant dense<0.000000e+00> : vector<128x128xf32>
      %20 = tpu.matmul %18, %19, %cst_17 {dimension_numbers = #tpu.dot_dimension_numbers<[1], [0], [0], [1], [0, 0, 1, 1], [], []>} : vector<128x128xbf16>, vector<128x128xbf16>, vector<128x128xf32> -> vector<128x128xf32>
      %21 = arith.truncf %20 : vector<128x128xf32> to vector<128x128xbf16>
      %c0_18 = arith.constant 0 : index
      %c0_19 = arith.constant 0 : index
      %22 = vector.load %arg6[%c0_18, %c0_19] : memref<128x128xbf16, #tpu.memory_space<vmem>>, vector<128x128xbf16>
      tpu.vector_store %arg6[%c0_18, %c0_19], %21 {strides = array<i32>} : memref<128x128xbf16, #tpu.memory_space<vmem>>, vector<128x128xbf16>,
    } else {
    }
    return
  }
  func.func @transform_0(%arg0: i32, %arg1: i32) -> (i32, i32) {
    %c0_i32 = arith.constant 0 : i32
    return %arg0, %arg1 : i32, i32
  }
  func.func @transform_1(%arg0: i32, %arg1: i32) -> (i32, i32) {
    %c0_i32 = arith.constant 0 : i32
    %c0_i32_0 = arith.constant 0 : i32
    return %arg1, %c0_i32 : i32, i32
  }
  func.func @transform_2(%arg0: i32, %arg1: i32) -> (i32, i32) {
    %c0_i32 = arith.constant 0 : i32
    %c0_i32_0 = arith.constant 0 : i32
    %c0_i32_1 = arith.constant 0 : i32
    return %c0_i32, %c0_i32_0 : i32, i32
  }
  func.func @transform_3(%arg0: i32, %arg1: i32) -> (i32, i32) {
    %c0_i32 = arith.constant 0 : i32
    %c0_i32_0 = arith.constant 0 : i32
    %c0_i32_1 = arith.constant 0 : i32
    return %c0_i32, %c0_i32_0 : i32, i32
  }
  func.func @transform_4(%arg0: i32, %arg1: i32) -> (i32, i32) {
    %c0_i32 = arith.constant 0 : i32
    %c0_i32_0 = arith.constant 0 : i32
    return %arg0, %c0_i32 : i32, i32
  }
}

</mosaic_0001>

<llo_original>
// kernel: tpu_custom_call.1
$region0: #{tpu_custom_call.1}
  #allocation0 [shape = 'u32[]', space=smem, size = 0x4, offset = 0x4, fixed_abs, tag = 'smem constant byte address 0x4 - core index']
  #allocation1 [shape = 'u32[144,128]{1,0:T(1,128)}', space=vmem, size = 0x12000, scoped, tag = 'internal scratch']
  #allocation2 [shape = 'f32[128,128]{1,0:T(8,128)}', space=vmem, size = 0x10000, scoped, tag = 'scratch operand']
  %s0 = inlined_call_operand.hbm [shape: bf16[128,128], index: 0, kind: input, shape index: {}]
  %s1 = inlined_call_operand.hbm [shape: bf16[128,128], index: 1, kind: input, shape index: {}]
  %s2 = inlined_call_operand.vmem [shape: f32[1,128], index: 2, kind: input, shape index: {}]
  %s3 = inlined_call_operand.hbm [shape: bf16[128,128], index: 3, kind: input, shape index: {}]
  %s4 = inlined_call_operand.hbm [shape: bf16[128,128], index: 4, kind: output, shape index: {}]
  %s5 = sld [smem:[#allocation0]]
  $region46: #{tpu_custom_call.1} parent=0
    _
  %s7 = ssub.s32 1, %s5
  %s8 = scalar_select 0, %s7, %s5
  $region1: #{tpu_custom_call.1} parent=0
    #allocation3 [shape = 'u8[32768]{0}', space=vmem, size = 0x8000, scoped, tag = 'input window, operand 0, single buffered']
    #allocation4 [shape = 's32[1]{0}', space=sflag, size = 0x4, scoped, tag = 'scoped memory for tpu_custom_call.1']
    #allocation5 [shape = 's32[1]{0}', space=sflag, size = 0x4, scoped, tag = 'scoped memory for tpu_custom_call.1']
    #allocation6 [shape = 'u8[32768]{0}', space=vmem, size = 0x8000, scoped, tag = 'input window, operand 1, single buffered']
    #allocation7 [shape = 's32[1]{0}', space=sflag, size = 0x4, scoped, tag = 'scoped memory for tpu_custom_call.1']
    #allocation8 [shape = 'u8[32768]{0}', space=vmem, size = 0x8000, scoped, tag = 'input window, operand 3, single buffered']
    #allocation9 [shape = 'u8[32768]{0}', space=vmem, size = 0x8000, scoped, tag = 'output window, operand 0, single buffered']
    %9 = vsyncpa [#allocation4], 0
    %10 = vsyncpa [#allocation7], 0
    %11 = vsyncpa [#allocation5], 0
    // Predicated region
    $region2: #{tpu_custom_call.1} parent=1 // pred_check
      _
    $region3: #{tpu_custom_call.1} parent=1 // pred_check_branch
      %13 = sbr.rel (0) target = $region5
    $region4: #{tpu_custom_call.1} parent=1 // pred_region
      %s15 = ssub.s32 1024, 1024
      %16 = vsyncadd [#allocation4], %s15
      %s17 = sshll.u32 [#allocation3], 4
      %s18 = int_to_ptr.vmem [resolvable:$true] %s17
      %23 = dma.hbm_to_vmem [thread:$0]  %s0, 1024, %s18, [#allocation4], 64, 64, 4
    $region5: #{tpu_custom_call.1} parent=1 // pred_fallthru
      _
    // Predicated region
    $region6: #{tpu_custom_call.1} parent=1 // pred_check
      _
    $region7: #{tpu_custom_call.1} parent=1 // pred_check_branch
      %25 = sbr.rel (0) target = $region9
    $region8: #{tpu_custom_call.1} parent=1 // pred_region
      %s27 = ssub.s32 1024, 1024
      %28 = vsyncadd [#allocation7], %s27
      %s29 = sshll.u32 [#allocation6], 4
      %s30 = int_to_ptr.vmem [resolvable:$true] %s29
      %35 = dma.hbm_to_vmem [thread:$0]  %s1, 1024, %s30, [#allocation7], 64, 64, 4
    $region9: #{tpu_custom_call.1} parent=1 // pred_fallthru
      _
    // Predicated region
    $region10: #{tpu_custom_call.1} parent=1 // pred_check
      _
    $region11: #{tpu_custom_call.1} parent=1 // pred_check_branch
      %37 = sbr.rel (0) target = $region13
    $region12: #{tpu_custom_call.1} parent=1 // pred_region
      _
    $region13: #{tpu_custom_call.1} parent=1 // pred_fallthru
      _
    // Predicated region
    $region14: #{tpu_custom_call.1} parent=1 // pred_check
      _
    $region15: #{tpu_custom_call.1} parent=1 // pred_check_branch
      %39 = sbr.rel (0) target = $region17
    $region16: #{tpu_custom_call.1} parent=1 // pred_region
      %s41 = ssub.s32 1024, 1024
      %42 = vsyncadd [#allocation7], %s41
      %s43 = sshll.u32 [#allocation8], 4
      %s44 = int_to_ptr.vmem [resolvable:$true] %s43
      %49 = dma.hbm_to_vmem [thread:$0]  %s3, 1024, %s44, [#allocation7], 64, 64, 4
    $region17: #{tpu_custom_call.1} parent=1 // pred_fallthru
      _
    // Predicated region
    $region18: #{tpu_custom_call.1} parent=1 // pred_check
      _
    $region19: #{tpu_custom_call.1} parent=1 // pred_check_branch
      %51 = sbr.rel (0) target = $region21
    $region20: #{tpu_custom_call.1} parent=1 // pred_region
      %52 = dma.done [#allocation4], 1024
    $region21: #{tpu_custom_call.1} parent=1 // pred_fallthru
      _
    // Predicated region
    $region22: #{tpu_custom_call.1} parent=1 // pred_check
      _
    $region23: #{tpu_custom_call.1} parent=1 // pred_check_branch
      %54 = sbr.rel (0) target = $region25
    $region24: #{tpu_custom_call.1} parent=1 // pred_region
      %55 = dma.done [#allocation7], 1024
    $region25: #{tpu_custom_call.1} parent=1 // pred_fallthru
      _
    // Predicated region
    $region26: #{tpu_custom_call.1} parent=1 // pred_check
      _
    $region27: #{tpu_custom_call.1} parent=1 // pred_check_branch
      %57 = sbr.rel (0) target = $region29
    $region28: #{tpu_custom_call.1} parent=1 // pred_region
      %58 = dma.done [#allocation7], 1024
    $region29: #{tpu_custom_call.1} parent=1 // pred_fallthru
      _
    %p60 = scmp.eq.s32.totalorder 0, 0
    // Predicated region
    $region30: #{tpu_custom_call.1} parent=1 // pred_check
      %p61 = pneg %p60
    $region31: #{tpu_custom_call.1} parent=1 // pred_check_branch
      %63 = sbr.rel (%p61) target = $region33
    $region32: #{tpu_custom_call.1} parent=1 // pred_region
      %64 = vst [vmem:[#allocation2] sm:$0xff] 0.0
      %65 = vst [vmem:[#allocation2 + $0x8] sm:$0xff] 0.0
      %66 = vst [vmem:[#allocation2 + $0x10] sm:$0xff] 0.0
      %67 = vst [vmem:[#allocation2 + $0x18] sm:$0xff] 0.0
      %68 = vst [vmem:[#allocation2 + $0x20] sm:$0xff] 0.0
      %69 = vst [vmem:[#allocation2 + $0x28] sm:$0xff] 0.0
      %70 = vst [vmem:[#allocation2 + $0x30] sm:$0xff] 0.0
      %71 = vst [vmem:[#allocation2 + $0x38] sm:$0xff] 0.0
      %72 = vst [vmem:[#allocation2 + $0x40] sm:$0xff] 0.0
      %73 = vst [vmem:[#allocation2 + $0x48] sm:$0xff] 0.0
      %74 = vst [vmem:[#allocation2 + $0x50] sm:$0xff] 0.0
      %75 = vst [vmem:[#allocation2 + $0x58] sm:$0xff] 0.0
      %76 = vst [vmem:[#allocation2 + $0x60] sm:$0xff] 0.0
      %77 = vst [vmem:[#allocation2 + $0x68] sm:$0xff] 0.0
      %78 = vst [vmem:[#allocation2 + $0x70] sm:$0xff] 0.0
      %79 = vst [vmem:[#allocation2 + $0x78] sm:$0xff] 0.0
    $region33: #{tpu_custom_call.1} parent=1 // pred_fallthru
      _
    %v80 = vld [vmem:[#allocation2] sm:$0xff]
    %v81 = vld [vmem:[#allocation2 + $0x8] sm:$0xff]
    %v82 = vld [vmem:[#allocation2 + $0x10] sm:$0xff]
    %v83 = vld [vmem:[#allocation2 + $0x18] sm:$0xff]
    %v84 = vld [vmem:[#allocation2 + $0x20] sm:$0xff]
    %v85 = vld [vmem:[#allocation2 + $0x28] sm:$0xff]
    %v86 = vld [vmem:[#allocation2 + $0x30] sm:$0xff]
    %v87 = vld [vmem:[#allocation2 + $0x38] sm:$0xff]
    %v88 = vld [vmem:[#allocation2 + $0x40] sm:$0xff]
    %v89 = vld [vmem:[#allocation2 + $0x48] sm:$0xff]
    %v90 = vld [vmem:[#allocation2 + $0x50] sm:$0xff]
    %v91 = vld [vmem:[#allocation2 + $0x58] sm:$0xff]
    %v92 = vld [vmem:[#allocation2 + $0x60] sm:$0xff]
    %v93 = vld [vmem:[#allocation2 + $0x68] sm:$0xff]
    %v94 = vld [vmem:[#allocation2 + $0x70] sm:$0xff]
    %v95 = vld [vmem:[#allocation2 + $0x78] sm:$0xff]
    %v96 = vld [vmem:[#allocation3] sm:$0xf]
    %v97 = vld [vmem:[#allocation3 + $0x4] sm:$0xf]
    %v98 = vld [vmem:[#allocation3 + $0x8] sm:$0xf]
    %v99 = vld [vmem:[#allocation3 + $0xc] sm:$0xf]
    %v100 = vld [vmem:[#allocation3 + $0x10] sm:$0xf]
    %v101 = vld [vmem:[#allocation3 + $0x14] sm:$0xf]
    %v102 = vld [vmem:[#allocation3 + $0x18] sm:$0xf]
    %v103 = vld [vmem:[#allocation3 + $0x1c] sm:$0xf]
    %v104 = vld [vmem:[#allocation3 + $0x20] sm:$0xf]
    %v105 = vld [vmem:[#allocation3 + $0x24] sm:$0xf]
    %v106 = vld [vmem:[#allocation3 + $0x28] sm:$0xf]
    %v107 = vld [vmem:[#allocation3 + $0x2c] sm:$0xf]
    %v108 = vld [vmem:[#allocation3 + $0x30] sm:$0xf]
    %v109 = vld [vmem:[#allocation3 + $0x34] sm:$0xf]
    %v110 = vld [vmem:[#allocation3 + $0x38] sm:$0xf]
    %v111 = vld [vmem:[#allocation3 + $0x3c] sm:$0xf]
    %v112 = vld [vmem:[#allocation6] sm:$0xf]
    %v113 = vld [vmem:[#allocation6 + $0x4] sm:$0xf]
    %v114 = vld [vmem:[#allocation6 + $0x8] sm:$0xf]
    %v115 = vld [vmem:[#allocation6 + $0xc] sm:$0xf]
    %v116 = vld [vmem:[#allocation6 + $0x10] sm:$0xf]
    %v117 = vld [vmem:[#allocation6 + $0x14] sm:$0xf]
    %v118 = vld [vmem:[#allocation6 + $0x18] sm:$0xf]
    %v119 = vld [vmem:[#allocation6 + $0x1c] sm:$0xf]
    %v120 = vld [vmem:[#allocation6 + $0x20] sm:$0xf]
    %v121 = vld [vmem:[#allocation6 + $0x24] sm:$0xf]
    %v122 = vld [vmem:[#allocation6 + $0x28] sm:$0xf]
    %v123 = vld [vmem:[#allocation6 + $0x2c] sm:$0xf]
    %v124 = vld [vmem:[#allocation6 + $0x30] sm:$0xf]
    %v125 = vld [vmem:[#allocation6 + $0x34] sm:$0xf]
    %v126 = vld [vmem:[#allocation6 + $0x38] sm:$0xf]
    %v127 = vld [vmem:[#allocation6 + $0x3c] sm:$0xf]
    %v144 = vunpack.c.l.b16 %v96
    %v145 = vunpack.c.l.b16 %v97
    %v146 = vunpack.c.l.b16 %v98
    %v147 = vunpack.c.l.b16 %v99
    %v148 = vunpack.c.l.b16 %v100
    %v149 = vunpack.c.l.b16 %v101
    %v150 = vunpack.c.l.b16 %v102
    %v151 = vunpack.c.l.b16 %v103
    %v152 = vunpack.c.l.b16 %v104
    %v153 = vunpack.c.l.b16 %v105
    %v154 = vunpack.c.l.b16 %v106
    %v155 = vunpack.c.l.b16 %v107
    %v156 = vunpack.c.l.b16 %v108
    %v157 = vunpack.c.l.b16 %v109
    %v158 = vunpack.c.l.b16 %v110
    %v159 = vunpack.c.l.b16 %v111
    %v160 = vpack.c.b16 %v145, %v144
    %v161 = vpack.c.b16 %v147, %v146
    %v162 = vpack.c.b16 %v149, %v148
    %v163 = vpack.c.b16 %v151, %v150
    %v164 = vpack.c.b16 %v153, %v152
    %v165 = vpack.c.b16 %v155, %v154
    %v166 = vpack.c.b16 %v157, %v156
    %v167 = vpack.c.b16 %v159, %v158
    %v192 = vunpack.c.l.b16 %v112
    %v193 = vunpack.c.l.b16 %v113
    %v194 = vunpack.c.l.b16 %v114
    %v195 = vunpack.c.l.b16 %v115
    %v196 = vunpack.c.l.b16 %v116
    %v197 = vunpack.c.l.b16 %v117
    %v198 = vunpack.c.l.b16 %v118
    %v199 = vunpack.c.l.b16 %v119
    %v200 = vunpack.c.l.b16 %v120
    %v201 = vunpack.c.l.b16 %v121
    %v202 = vunpack.c.l.b16 %v122
    %v203 = vunpack.c.l.b16 %v123
    %v204 = vunpack.c.l.b16 %v124
    %v205 = vunpack.c.l.b16 %v125
    %v206 = vunpack.c.l.b16 %v126
    %v207 = vunpack.c.l.b16 %v127
    %v208 = vpack.c.b16 %v193, %v192
    %v209 = vpack.c.b16 %v195, %v194
    %v210 = vpack.c.b16 %v197, %v196
    %v211 = vpack.c.b16 %v199, %v198
    %v212 = vpack.c.b16 %v201, %v200
    %v213 = vpack.c.b16 %v203, %v202
    %v214 = vpack.c.b16 %v205, %v204
    %v215 = vpack.c.b16 %v207, %v206
    %224 = vmatprep.subr.bf16.mxu0 0
    %225 = vmatpush1.bf16.msra.mxu0 %v208
    %226 = vmatprep.subr.bf16.mxu0 0
    %227 = vmatpush1.bf16.msra.mxu0 %v209
    %228 = vmatprep.subr.bf16.mxu0 0
    %229 = vmatpush1.bf16.msra.mxu0 %v210
    %230 = vmatprep.subr.bf16.mxu0 0
    %231 = vmatpush1.bf16.msra.mxu0 %v211
    %232 = vmatprep.subr.bf16.mxu0 0
    %233 = vmatpush1.bf16.msra.mxu0 %v212
    %234 = vmatprep.subr.bf16.mxu0 0
    %235 = vmatpush1.bf16.msra.mxu0 %v213
    %236 = vmatprep.subr.bf16.mxu0 0
    %237 = vmatpush1.bf16.msra.mxu0 %v214
    %238 = vmatprep.subr.bf16.mxu0 0
    %239 = vmatpush1.bf16.msra.mxu0 %v215
    %240 = vmatprep.subr.bf16.mxu0 0
    %241 = vmatpush1.bf16.msra.mxu0 0
    %242 = vmatprep.subr.bf16.mxu0 0
    %243 = vmatpush1.bf16.msra.mxu0 0
    %244 = vmatprep.subr.bf16.mxu0 0
    %245 = vmatpush1.bf16.msra.mxu0 0
    %246 = vmatprep.subr.bf16.mxu0 0
    %247 = vmatpush1.bf16.msra.mxu0 0
    %248 = vmatprep.subr.bf16.mxu0 0
    %249 = vmatpush1.bf16.msra.mxu0 0
    %250 = vmatprep.subr.bf16.mxu0 0
    %251 = vmatpush1.bf16.msra.mxu0 0
    %252 = vmatprep.subr.bf16.mxu0 0
    %253 = vmatpush1.bf16.msra.mxu0 0
    %254 = vmatprep.subr.bf16.mxu0 0
    %255 = vmatpush1.bf16.msra.mxu0 0
    %256 = vmatprep.mubr.bf16.mxu0 0
    %257 = vmatmul.mubr.bf16.gmra.mrb[0].mxu0 %v160
    %v258 = vpop.f32.mrb[0].mxu0
    %v259 = vadd.f32 0.0, %v258
    %v260 = vpop.f32.mrb[0].mxu0
    %v261 = vpop.f32.mrb[0].mxu0
    %v262 = vadd.f32 0.0, %v261
    %v263 = vpop.f32.mrb[0].mxu0
    %264 = vmatprep.mubr.bf16.mxu0 0
    %265 = vmatmul.mubr.bf16.gmra.mrb[0].mxu0 %v161
    %v266 = vpop.f32.mrb[0].mxu0
    %v267 = vadd.f32 0.0, %v266
    %v268 = vpop.f32.mrb[0].mxu0
    %v269 = vpop.f32.mrb[0].mxu0
    %v270 = vadd.f32 0.0, %v269
    %v271 = vpop.f32.mrb[0].mxu0
    %272 = vmatprep.mubr.bf16.mxu0 0
    %273 = vmatmul.mubr.bf16.gmra.mrb[0].mxu0 %v162
    %v274 = vpop.f32.mrb[0].mxu0
    %v275 = vadd.f32 0.0, %v274
    %v276 = vpop.f32.mrb[0].mxu0
    %v277 = vpop.f32.mrb[0].mxu0
    %v278 = vadd.f32 0.0, %v277
    %v279 = vpop.f32.mrb[0].mxu0
    %280 = vmatprep.mubr.bf16.mxu0 0
    %281 = vmatmul.mubr.bf16.gmra.mrb[0].mxu0 %v163
    %v282 = vpop.f32.mrb[0].mxu0
    %v283 = vadd.f32 0.0, %v282
    %v284 = vpop.f32.mrb[0].mxu0
    %v285 = vpop.f32.mrb[0].mxu0
    %v286 = vadd.f32 0.0, %v285
    %v287 = vpop.f32.mrb[0].mxu0
    %288 = vmatprep.mubr.bf16.mxu0 0
    %289 = vmatmul.mubr.bf16.gmra.mrb[0].mxu0 %v164
    %v290 = vpop.f32.mrb[0].mxu0
    %v291 = vadd.f32 0.0, %v290
    %v292 = vpop.f32.mrb[0].mxu0
    %v293 = vpop.f32.mrb[0].mxu0
    %v294 = vadd.f32 0.0, %v293
    %v295 = vpop.f32.mrb[0].mxu0
    %296 = vmatprep.mubr.bf16.mxu0 0
    %297 = vmatmul.mubr.bf16.gmra.mrb[0].mxu0 %v165
    %v298 = vpop.f32.mrb[0].mxu0
    %v299 = vadd.f32 0.0, %v298
    %v300 = vpop.f32.mrb[0].mxu0
    %v301 = vpop.f32.mrb[0].mxu0
    %v302 = vadd.f32 0.0, %v301
    %v303 = vpop.f32.mrb[0].mxu0
    %304 = vmatprep.mubr.bf16.mxu0 0
    %305 = vmatmul.mubr.bf16.gmra.mrb[0].mxu0 %v166
    %v306 = vpop.f32.mrb[0].mxu0
    %v307 = vadd.f32 0.0, %v306
    %v308 = vpop.f32.mrb[0].mxu0
    %v309 = vpop.f32.mrb[0].mxu0
    %v310 = vadd.f32 0.0, %v309
    %v311 = vpop.f32.mrb[0].mxu0
    %312 = vmatprep.mubr.bf16.mxu0 0
    %313 = vmatmul.mubr.bf16.gmra.mrb[0].mxu0 %v167
    %v314 = vpop.f32.mrb[0].mxu0
    %v315 = vadd.f32 0.0, %v314
    %v316 = vpop.f32.mrb[0].mxu0
    %v317 = vpop.f32.mrb[0].mxu0
    %v318 = vadd.f32 0.0, %v317
    %v319 = vpop.f32.mrb[0].mxu0
    %320 = vdwg.mxu0
    %v321 = vadd.f32 %v80, %v259
    %v322 = vadd.f32 %v81, %v262
    %v323 = vadd.f32 %v82, %v267
    %v324 = vadd.f32 %v83, %v270
    %v325 = vadd.f32 %v84, %v275
    %v326 = vadd.f32 %v85, %v278
    %v327 = vadd.f32 %v86, %v283
    %v328 = vadd.f32 %v87, %v286
    %v329 = vadd.f32 %v88, %v291
    %v330 = vadd.f32 %v89, %v294
    %v331 = vadd.f32 %v90, %v299
    %v332 = vadd.f32 %v91, %v302
    %v333 = vadd.f32 %v92, %v307
    %v334 = vadd.f32 %v93, %v310
    %v335 = vadd.f32 %v94, %v315
    %v336 = vadd.f32 %v95, %v318
    %337 = vst [vmem:[#allocation2] sm:$0xff] %v321
    %338 = vst [vmem:[#allocation2 + $0x8] sm:$0xff] %v322
    %339 = vst [vmem:[#allocation2 + $0x10] sm:$0xff] %v323
    %340 = vst [vmem:[#allocation2 + $0x18] sm:$0xff] %v324
    %341 = vst [vmem:[#allocation2 + $0x20] sm:$0xff] %v325
    %342 = vst [vmem:[#allocation2 + $0x28] sm:$0xff] %v326
    %343 = vst [vmem:[#allocation2 + $0x30] sm:$0xff] %v327
    %344 = vst [vmem:[#allocation2 + $0x38] sm:$0xff] %v328
    %345 = vst [vmem:[#allocation2 + $0x40] sm:$0xff] %v329
    %346 = vst [vmem:[#allocation2 + $0x48] sm:$0xff] %v330
    %347 = vst [vmem:[#allocation2 + $0x50] sm:$0xff] %v331
    %348 = vst [vmem:[#allocation2 + $0x58] sm:$0xff] %v332
    %349 = vst [vmem:[#allocation2 + $0x60] sm:$0xff] %v333
    %350 = vst [vmem:[#allocation2 + $0x68] sm:$0xff] %v334
    %351 = vst [vmem:[#allocation2 + $0x70] sm:$0xff] %v335
    %352 = vst [vmem:[#allocation2 + $0x78] sm:$0xff] %v336
    // Predicated region
    $region34: #{tpu_custom_call.1} parent=1 // pred_check
      %p353 = pneg %p60
    $region35: #{tpu_custom_call.1} parent=1 // pred_check_branch
      %355 = sbr.rel (%p353) target = $region37
    $region36: #{tpu_custom_call.1} parent=1 // pred_region
      %v356 = vld [vmem:[#allocation2] sm:$0xff]
      %v357 = vld [vmem:[#allocation2 + $0x8] sm:$0xff]
      %v358 = vld [vmem:[#allocation2 + $0x10] sm:$0xff]
      %v359 = vld [vmem:[#allocation2 + $0x18] sm:$0xff]
      %v360 = vld [vmem:[#allocation2 + $0x20] sm:$0xff]
      %v361 = vld [vmem:[#allocation2 + $0x28] sm:$0xff]
      %v362 = vld [vmem:[#allocation2 + $0x30] sm:$0xff]
      %v363 = vld [vmem:[#allocation2 + $0x38] sm:$0xff]
      %v364 = vld [vmem:[#allocation2 + $0x40] sm:$0xff]
      %v365 = vld [vmem:[#allocation2 + $0x48] sm:$0xff]
      %v366 = vld [vmem:[#allocation2 + $0x50] sm:$0xff]
      %v367 = vld [vmem:[#allocation2 + $0x58] sm:$0xff]
      %v368 = vld [vmem:[#allocation2 + $0x60] sm:$0xff]
      %v369 = vld [vmem:[#allocation2 + $0x68] sm:$0xff]
      %v370 = vld [vmem:[#allocation2 + $0x70] sm:$0xff]
      %v371 = vld [vmem:[#allocation2 + $0x78] sm:$0xff]
      %v372 = vld [vmem:[%s2] sm:$0x1]
      %v374 = vlaneseq
      %v375 = vshrl.u32 %v374, 7
      %v376 = vsub.s32 0, %v375
      %v377 = vrot.slane %v372, %v376
      %v379 = vadd.f32 %v356, %v377
      %v380 = vadd.f32 %v357, %v377
      %v381 = vadd.f32 %v358, %v377
      %v382 = vadd.f32 %v359, %v377
      %v383 = vadd.f32 %v360, %v377
      %v384 = vadd.f32 %v361, %v377
      %v385 = vadd.f32 %v362, %v377
      %v386 = vadd.f32 %v363, %v377
      %v387 = vadd.f32 %v364, %v377
      %v388 = vadd.f32 %v365, %v377
      %v389 = vadd.f32 %v366, %v377
      %v390 = vadd.f32 %v367, %v377
      %v391 = vadd.f32 %v368, %v377
      %v392 = vadd.f32 %v369, %v377
      %v393 = vadd.f32 %v370, %v377
      %v394 = vadd.f32 %v371, %v377
      %v395 = vmax.f32 %v379, 0.0
      %v396 = vmax.f32 %v380, 0.0
      %v397 = vmax.f32 %v381, 0.0
      %v398 = vmax.f32 %v382, 0.0
      %v399 = vmax.f32 %v383, 0.0
      %v400 = vmax.f32 %v384, 0.0
      %v401 = vmax.f32 %v385, 0.0
      %v402 = vmax.f32 %v386, 0.0
      %v403 = vmax.f32 %v387, 0.0
      %v404 = vmax.f32 %v388, 0.0
      %v405 = vmax.f32 %v389, 0.0
      %v406 = vmax.f32 %v390, 0.0
      %v407 = vmax.f32 %v391, 0.0
      %v408 = vmax.f32 %v392, 0.0
      %v409 = vmax.f32 %v393, 0.0
      %v410 = vmax.f32 %v394, 0.0
      %v411 = vpack.c.bf16 %v396, %v395
      %v412 = vpack.c.bf16 %v398, %v397
      %v413 = vpack.c.bf16 %v400, %v399
      %v414 = vpack.c.bf16 %v402, %v401
      %v415 = vpack.c.bf16 %v404, %v403
      %v416 = vpack.c.bf16 %v406, %v405
      %v417 = vpack.c.bf16 %v408, %v407
      %v418 = vpack.c.bf16 %v410, %v409
      %v419 = vld [vmem:[#allocation8] sm:$0xf]
      %v420 = vld [vmem:[#allocation8 + $0x4] sm:$0xf]
      %v421 = vld [vmem:[#allocation8 + $0x8] sm:$0xf]
      %v422 = vld [vmem:[#allocation8 + $0xc] sm:$0xf]
      %v423 = vld [vmem:[#allocation8 + $0x10] sm:$0xf]
      %v424 = vld [vmem:[#allocation8 + $0x14] sm:$0xf]
      %v425 = vld [vmem:[#allocation8 + $0x18] sm:$0xf]
      %v426 = vld [vmem:[#allocation8 + $0x1c] sm:$0xf]
      %v427 = vld [vmem:[#allocation8 + $0x20] sm:$0xf]
      %v428 = vld [vmem:[#allocation8 + $0x24] sm:$0xf]
      %v429 = vld [vmem:[#allocation8 + $0x28] sm:$0xf]
      %v430 = vld [vmem:[#allocation8 + $0x2c] sm:$0xf]
      %v431 = vld [vmem:[#allocation8 + $0x30] sm:$0xf]
      %v432 = vld [vmem:[#allocation8 + $0x34] sm:$0xf]
      %v433 = vld [vmem:[#allocation8 + $0x38] sm:$0xf]
      %v434 = vld [vmem:[#allocation8 + $0x3c] sm:$0xf]
      %v451 = vunpack.c.l.b16 %v419
      %v452 = vunpack.c.l.b16 %v420
      %v453 = vunpack.c.l.b16 %v421
      %v454 = vunpack.c.l.b16 %v422
      %v455 = vunpack.c.l.b16 %v423
      %v456 = vunpack.c.l.b16 %v424
      %v457 = vunpack.c.l.b16 %v425
      %v458 = vunpack.c.l.b16 %v426
      %v459 = vunpack.c.l.b16 %v427
      %v460 = vunpack.c.l.b16 %v428
      %v461 = vunpack.c.l.b16 %v429
      %v462 = vunpack.c.l.b16 %v430
      %v463 = vunpack.c.l.b16 %v431
      %v464 = vunpack.c.l.b16 %v432
      %v465 = vunpack.c.l.b16 %v433
      %v466 = vunpack.c.l.b16 %v434
      %v467 = vpack.c.b16 %v452, %v451
      %v468 = vpack.c.b16 %v454, %v453
      %v469 = vpack.c.b16 %v456, %v455
      %v470 = vpack.c.b16 %v458, %v457
      %v471 = vpack.c.b16 %v460, %v459
      %v472 = vpack.c.b16 %v462, %v461
      %v473 = vpack.c.b16 %v464, %v463
      %v474 = vpack.c.b16 %v466, %v465
      %483 = vmatprep.subr.bf16.mxu0 0
      %484 = vmatpush1.bf16.msra.mxu0 %v467
      %485 = vmatprep.subr.bf16.mxu0 0
      %486 = vmatpush1.bf16.msra.mxu0 %v468
      %487 = vmatprep.subr.bf16.mxu0 0
      %488 = vmatpush1.bf16.msra.mxu0 %v469
      %489 = vmatprep.subr.bf16.mxu0 0
      %490 = vmatpush1.bf16.msra.mxu0 %v470
      %491 = vmatprep.subr.bf16.mxu0 0
      %492 = vmatpush1.bf16.msra.mxu0 %v471
      %493 = vmatprep.subr.bf16.mxu0 0
      %494 = vmatpush1.bf16.msra.mxu0 %v472
      %495 = vmatprep.subr.bf16.mxu0 0
      %496 = vmatpush1.bf16.msra.mxu0 %v473
      %497 = vmatprep.subr.bf16.mxu0 0
      %498 = vmatpush1.bf16.msra.mxu0 %v474
      %499 = vmatprep.subr.bf16.mxu0 0
      %500 = vmatpush1.bf16.msra.mxu0 0
      %501 = vmatprep.subr.bf16.mxu0 0
      %502 = vmatpush1.bf16.msra.mxu0 0
      %503 = vmatprep.subr.bf16.mxu0 0
      %504 = vmatpush1.bf16.msra.mxu0 0
      %505 = vmatprep.subr.bf16.mxu0 0
      %506 = vmatpush1.bf16.msra.mxu0 0
      %507 = vmatprep.subr.bf16.mxu0 0
      %508 = vmatpush1.bf16.msra.mxu0 0
      %509 = vmatprep.subr.bf16.mxu0 0
      %510 = vmatpush1.bf16.msra.mxu0 0
      %511 = vmatprep.subr.bf16.mxu0 0
      %512 = vmatpush1.bf16.msra.mxu0 0
      %513 = vmatprep.subr.bf16.mxu0 0
      %514 = vmatpush1.bf16.msra.mxu0 0
      %515 = vmatprep.mubr.bf16.mxu0 0
      %516 = vmatmul.mubr.bf16.gmra.mrb[0].mxu0 %v411
      %v517 = vpop.f32.mrb[0].mxu0
      %v518 = vadd.f32 0.0, %v517
      %v519 = vpop.f32.mrb[0].mxu0
      %v520 = vpop.f32.mrb[0].mxu0
      %v521 = vadd.f32 0.0, %v520
      %v522 = vpop.f32.mrb[0].mxu0
      %523 = vmatprep.mubr.bf16.mxu0 0
      %524 = vmatmul.mubr.bf16.gmra.mrb[0].mxu0 %v412
      %v525 = vpop.f32.mrb[0].mxu0
      %v526 = vadd.f32 0.0, %v525
      %v527 = vpop.f32.mrb[0].mxu0
      %v528 = vpop.f32.mrb[0].mxu0
      %v529 = vadd.f32 0.0, %v528
      %v530 = vpop.f32.mrb[0].mxu0
      %531 = vmatprep.mubr.bf16.mxu0 0
      %532 = vmatmul.mubr.bf16.gmra.mrb[0].mxu0 %v413
      %v533 = vpop.f32.mrb[0].mxu0
      %v534 = vadd.f32 0.0, %v533
      %v535 = vpop.f32.mrb[0].mxu0
      %v536 = vpop.f32.mrb[0].mxu0
      %v537 = vadd.f32 0.0, %v536
      %v538 = vpop.f32.mrb[0].mxu0
      %539 = vmatprep.mubr.bf16.mxu0 0
      %540 = vmatmul.mubr.bf16.gmra.mrb[0].mxu0 %v414
      %v541 = vpop.f32.mrb[0].mxu0
      %v542 = vadd.f32 0.0, %v541
      %v543 = vpop.f32.mrb[0].mxu0
      %v544 = vpop.f32.mrb[0].mxu0
      %v545 = vadd.f32 0.0, %v544
      %v546 = vpop.f32.mrb[0].mxu0
      %547 = vmatprep.mubr.bf16.mxu0 0
      %548 = vmatmul.mubr.bf16.gmra.mrb[0].mxu0 %v415
      %v549 = vpop.f32.mrb[0].mxu0
      %v550 = vadd.f32 0.0, %v549
      %v551 = vpop.f32.mrb[0].mxu0
      %v552 = vpop.f32.mrb[0].mxu0
      %v553 = vadd.f32 0.0, %v552
      %v554 = vpop.f32.mrb[0].mxu0
      %555 = vmatprep.mubr.bf16.mxu0 0
      %556 = vmatmul.mubr.bf16.gmra.mrb[0].mxu0 %v416
      %v557 = vpop.f32.mrb[0].mxu0
      %v558 = vadd.f32 0.0, %v557
      %v559 = vpop.f32.mrb[0].mxu0
      %v560 = vpop.f32.mrb[0].mxu0
      %v561 = vadd.f32 0.0, %v560
      %v562 = vpop.f32.mrb[0].mxu0
      %563 = vmatprep.mubr.bf16.mxu0 0
      %564 = vmatmul.mubr.bf16.gmra.mrb[0].mxu0 %v417
      %v565 = vpop.f32.mrb[0].mxu0
      %v566 = vadd.f32 0.0, %v565
      %v567 = vpop.f32.mrb[0].mxu0
      %v568 = vpop.f32.mrb[0].mxu0
      %v569 = vadd.f32 0.0, %v568
      %v570 = vpop.f32.mrb[0].mxu0
      %571 = vmatprep.mubr.bf16.mxu0 0
      %572 = vmatmul.mubr.bf16.gmra.mrb[0].mxu0 %v418
      %v573 = vpop.f32.mrb[0].mxu0
      %v574 = vadd.f32 0.0, %v573
      %v575 = vpop.f32.mrb[0].mxu0
      %v576 = vpop.f32.mrb[0].mxu0
      %v577 = vadd.f32 0.0, %v576
      %v578 = vpop.f32.mrb[0].mxu0
      %579 = vdwg.mxu0
      %v580 = vpack.c.bf16 %v521, %v518
      %v581 = vpack.c.bf16 %v529, %v526
      %v582 = vpack.c.bf16 %v537, %v534
      %v583 = vpack.c.bf16 %v545, %v542
      %v584 = vpack.c.bf16 %v553, %v550
      %v585 = vpack.c.bf16 %v561, %v558
      %v586 = vpack.c.bf16 %v569, %v566
      %v587 = vpack.c.bf16 %v577, %v574
      %v596 = vunpack.c.l.b16 %v580
      %v597 = vunpack.c.h.b16 %v580
      %v598 = vunpack.c.l.b16 %v581
      %v599 = vunpack.c.h.b16 %v581
      %v600 = vunpack.c.l.b16 %v582
      %v601 = vunpack.c.h.b16 %v582
      %v602 = vunpack.c.l.b16 %v583
      %v603 = vunpack.c.h.b16 %v583
      %v604 = vunpack.c.l.b16 %v584
      %v605 = vunpack.c.h.b16 %v584
      %v606 = vunpack.c.l.b16 %v585
      %v607 = vunpack.c.h.b16 %v585
      %v608 = vunpack.c.l.b16 %v586
      %v609 = vunpack.c.h.b16 %v586
      %v610 = vunpack.c.l.b16 %v587
      %v611 = vunpack.c.h.b16 %v587
      %v612 = vpack.c.b16 %v596, %v596
      %v613 = vpack.c.b16 %v597, %v597
      %v614 = vpack.c.b16 %v598, %v598
      %v615 = vpack.c.b16 %v599, %v599
      %v616 = vpack.c.b16 %v600, %v600
      %v617 = vpack.c.b16 %v601, %v601
      %v618 = vpack.c.b16 %v602, %v602
      %v619 = vpack.c.b16 %v603, %v603
      %v620 = vpack.c.b16 %v604, %v604
      %v621 = vpack.c.b16 %v605, %v605
      %v622 = vpack.c.b16 %v606, %v606
      %v623 = vpack.c.b16 %v607, %v607
      %v624 = vpack.c.b16 %v608, %v608
      %v625 = vpack.c.b16 %v609, %v609
      %v626 = vpack.c.b16 %v610, %v610
      %v627 = vpack.c.b16 %v611, %v611
      %644 = vst [vmem:[#allocation9] sm:$0xf] %v612
      %645 = vst [vmem:[#allocation9 + $0x4] sm:$0xf] %v613
      %646 = vst [vmem:[#allocation9 + $0x8] sm:$0xf] %v614
      %647 = vst [vmem:[#allocation9 + $0xc] sm:$0xf] %v615
      %648 = vst [vmem:[#allocation9 + $0x10] sm:$0xf] %v616
      %649 = vst [vmem:[#allocation9 + $0x14] sm:$0xf] %v617
      %650 = vst [vmem:[#allocation9 + $0x18] sm:$0xf] %v618
      %651 = vst [vmem:[#allocation9 + $0x1c] sm:$0xf] %v619
      %652 = vst [vmem:[#allocation9 + $0x20] sm:$0xf] %v620
      %653 = vst [vmem:[#allocation9 + $0x24] sm:$0xf] %v621
      %654 = vst [vmem:[#allocation9 + $0x28] sm:$0xf] %v622
      %655 = vst [vmem:[#allocation9 + $0x2c] sm:$0xf] %v623
      %656 = vst [vmem:[#allocation9 + $0x30] sm:$0xf] %v624
      %657 = vst [vmem:[#allocation9 + $0x34] sm:$0xf] %v625
      %658 = vst [vmem:[#allocation9 + $0x38] sm:$0xf] %v626
      %659 = vst [vmem:[#allocation9 + $0x3c] sm:$0xf] %v627
    $region37: #{tpu_custom_call.1} parent=1 // pred_fallthru
      _
    // Predicated region
    $region38: #{tpu_custom_call.1} parent=1 // pred_check
      _
    $region39: #{tpu_custom_call.1} parent=1 // pred_check_branch
      %661 = sbr.rel (0) target = $region41
    $region40: #{tpu_custom_call.1} parent=1 // pred_region
      %s663 = ssub.s32 1024, 1024
      %664 = vsyncadd [#allocation5], %s663
      %s665 = sshll.u32 [#allocation9], 4
      %s666 = int_to_ptr.vmem [resolvable:$true] %s665
      %671 = dma.vmem_to_hbm [thread:$0]  %s666, 1024, %s4, [#allocation5], 64, 64, 4
    $region41: #{tpu_custom_call.1} parent=1 // pred_fallthru
      _
    // Predicated region
    $region42: #{tpu_custom_call.1} parent=1 // pred_check
      _
    $region43: #{tpu_custom_call.1} parent=1 // pred_check_branch
      %673 = sbr.rel (0) target = $region45
    $region44: #{tpu_custom_call.1} parent=1 // pred_region
      %674 = dma.done [#allocation5], 1024
    $region45: #{tpu_custom_call.1} parent=1 // pred_fallthru
      _
    %675 = vsyncpa [#allocation4], 1
    %676 = vsyncpa [#allocation7], 1
    %677 = vsyncpa [#allocation5], 1

</llo_original>
